<compile_context>
chip_gen: v7x
topology: tpu7x:2x2x1
jax: 0.10.0
libtpu: 0.0.40
codegen_flags: <defaults>
</compile_context>

<pallas_src>
import functools

import jax
import jax.numpy as jnp
from jax.experimental import pallas as pl
from jax.experimental.pallas import tpu as pltpu


def _round_up(x, m):
    return ((x + m - 1) // m) * m


def _cdiv(a, b):
    return -(-a // b)


def _device_kind():
    try:
        return jax.devices()[0].device_kind.lower()
    except Exception:
        return ""


def _jsd_kernel(p_ref, q_ref, out_ref, acc_ref, *,
                true_b, tb, tiles_per_split, n_classes):
    s = pl.program_id(0)   # split axis ("parallel"; shards across TCs on v7x)
    i = pl.program_id(1)   # reduction over row tiles ("arbitrary")

    @pl.when(i == 0)
    def _():
        acc_ref[...] = jnp.zeros_like(acc_ref)

    p = p_ref[...].astype(jnp.float32)
    q = q_ref[...].astype(jnp.float32)

    def softmax_pair(x):
        # Returns (softmax(x), log_softmax(x)) with a single exp per element.
        m = jnp.max(x, axis=-1, keepdims=True)
        z = x - m
        ez = jnp.exp(z)                                  # 1 exp / element (EUP)
        se = jnp.sum(ez, axis=-1, keepdims=True)
        log_sm = z - jnp.log(se)                         # 1 log / row
        sm = ez * (1.0 / se)                             # exact per-row divide
        return sm, log_sm

    sp, lp = softmax_pair(p)
    sq, lq = softmax_pair(q)

    # m = 0.5*(p+q); clamp to the smallest normal so fully-underflowed rows
    # give 0 * finite = 0 instead of 0 * inf = NaN.
    tiny = jnp.float32(jnp.finfo(jnp.float32).tiny)
    log_m = jnp.log(jnp.maximum(0.5 * (sp + sq), tiny))  # 1 log / element

    # KL(p || m) + KL(q || m) pointwise terms (summed later).
    term = sp * (lp - log_m) + sq * (lq - log_m)

    def fold(t):
        # Sublane-group fold into the resident (8, C) accumulator: pure VPU
        # adds every step; the cross-lane collapse happens once in finalize.
        return jnp.sum(t.reshape(tb // 8, 8, n_classes), axis=0)

    row0 = (s * tiles_per_split + i) * tb
    needs_mask = row0 + tb > true_b

    @pl.when(row0 + tb <= true_b)
    def _():  # steady-state fast path: no iota / compare / select
        acc_ref[...] += fold(term)

    @pl.when(needs_mask)
    def _():  # boundary (or fully out-of-range) tile: zero padded rows
        rows = row0 + jax.lax.broadcasted_iota(jnp.int32, (tb, 1), 0)
        acc_ref[...] += fold(jnp.where(rows < true_b, term, 0.0))

    @pl.when(i == tiles_per_split - 1)
    def _():
        total = jnp.sum(acc_ref[...])
        # Lane-dense (8,128) block write; wrapper picks element [0, 0] per split.
        out_ref[...] = jnp.broadcast_to(total, out_ref.shape).astype(jnp.float32)


def jsd_loss(p, q, *, num_splits=None, tb=None):
    """Pallas-TPU Jensen-Shannon divergence loss. p, q: (B, C) logits."""
    assert p.shape == q.shape and p.ndim == 2
    B, C = p.shape
    itemsize = jnp.dtype(p.dtype).itemsize

    kind = _device_kind()
    is_v7x = ("v7" in kind) or ("7x" in kind)
    is_v6 = "v6" in kind

    # Split axis only pays off on dual-TensorCore chips (v7x).
    if num_splits is None:
        num_splits = 2 if is_v7x else 1

    # Row multiple: keep sublane packing full (8 rows f32, 16 rows bf16/fp16).
    rows_mult = 8 * max(1, 4 // max(1, itemsize))

    # Tile rows sized purely by bytes (f32 working-set bytes), no hard row cap.
    if tb is None:
        tile_bytes = (6 << 20) if is_v6 else (4 << 20)
        tb = tile_bytes // max(1, C * 4)
    tb = max(rows_mult, (tb // rows_mult) * rows_mult)
    tb = min(tb, _round_up(B, rows_mult))

    total_tiles = _cdiv(B, tb)
    if num_splits > 1 and total_tiles < num_splits:
        # Give every split at least one real tile (v7x small-B case),
        # otherwise fall back to a single split.
        tb_alt = _round_up(_cdiv(B, num_splits), rows_mult)
        if _cdiv(B, tb_alt) >= num_splits:
            tb = tb_alt
            total_tiles = _cdiv(B, tb)
        else:
            num_splits = 1

    tiles_per_split = _cdiv(total_tiles, num_splits)
    grid = (num_splits, tiles_per_split)
    last_tile = total_tiles - 1

    kernel = functools.partial(
        _jsd_kernel, true_b=B, tb=tb,
        tiles_per_split=tiles_per_split, n_classes=C)

    def in_idx(s, i):
        # Clamp fully-out-of-range tile indices (their contribution is masked
        # to zero in-kernel); partial last blocks are handled by Pallas + mask.
        t = s * tiles_per_split + i
        return (jnp.minimum(t, last_tile), 0)

    in_spec = pl.BlockSpec((tb, C), in_idx)

    # Explicit VMEM budget: v7x has only 64 MiB physical per TC.
    vmem_limit = (48 << 20) if is_v7x else (80 << 20)

    out = pl.pallas_call(
        kernel,
        out_shape=jax.ShapeDtypeStruct((num_splits * 8, 128), jnp.float32),
        grid_spec=pltpu.PrefetchScalarGridSpec(
            num_scalar_prefetch=0,
            grid=grid,
            in_specs=[in_spec, in_spec],
            out_specs=pl.BlockSpec((8, 128), lambda s, i: (s, 0)),
            scratch_shapes=[pltpu.VMEM((8, C), jnp.float32)],
        ),
        compiler_params=pltpu.CompilerParams(
            dimension_semantics=("parallel", "arbitrary"),
            vmem_limit_bytes=vmem_limit),
    )(p, q)

    partials = out[0::8, 0]                 # one partial sum per split
    return 0.5 * jnp.sum(partials) / jnp.float32(B)


def _jsd_loss_ref(p, q):
    """Plain-JAX reference mirroring the PyTorch module."""
    sp = jax.nn.softmax(p.astype(jnp.float32), axis=1)
    sq = jax.nn.softmax(q.astype(jnp.float32), axis=1)
    B = sp.shape[0]
    log_m = jnp.log(0.5 * (sp + sq))
    kl_pm = jnp.sum(sp * (jnp.log(sp) - log_m)) / B
    kl_qm = jnp.sum(sq * (jnp.log(sq) - log_m)) / B
    return 0.5 * (kl_pm + kl_qm)


if __name__ == "__main__":
    key = jax.random.PRNGKey(0)
    kp, kq = jax.random.split(key)

    # Primary small-shape check: batch=8, classes/hidden=32.
    B, C = 8, 32
    p = jax.random.normal(kp, (B, C), dtype=jnp.float32)
    q = jax.random.normal(kq, (B, C), dtype=jnp.float32)
    out = jsd_loss(p, q)
    jax.block_until_ready(out)
    ref = _jsd_loss_ref(p, q)
    assert jnp.allclose(out, ref, atol=1e-5, rtol=1e-4), (out, ref)

    # Batch not a multiple of the row tile (exercises the partial-block mask,
    # with no wrapper-side padding copy).
    B2, C2 = 10, 40
    p2 = jax.random.normal(kp, (B2, C2), dtype=jnp.float32)
    q2 = jax.random.normal(kq, (B2, C2), dtype=jnp.float32)
    out2 = jsd_loss(p2, q2)
    jax.block_until_ready(out2)
    ref2 = _jsd_loss_ref(p2, q2)
    assert jnp.allclose(out2, ref2, atol=1e-5, rtol=1e-4), (out2, ref2)

    # Multi-tile reduction path (forced small tile) + boundary tile mask.
    B3, C3 = 300, 128
    p3 = jax.random.normal(kp, (B3, C3), dtype=jnp.float32)
    q3 = jax.random.normal(kq, (B3, C3), dtype=jnp.float32)
    out3 = jsd_loss(p3, q3, tb=64)
    jax.block_until_ready(out3)
    ref3 = _jsd_loss_ref(p3, q3)
    assert jnp.allclose(out3, ref3, atol=1e-5, rtol=1e-4), (out3, ref3)

    print("KERNEL_OK")
</pallas_src>

<mosaic_0001>
module attributes {stable_mosaic.version = 11 : i64} {
  func.func @_jsd_kernel(%arg0: i32, %arg1: i32, %arg2: memref<8x32xf32, #tpu.memory_space<vmem>>, %arg3: memref<8x32xf32, #tpu.memory_space<vmem>>, %arg4: memref<8x128xf32, #tpu.memory_space<vmem>>, %arg5: memref<8x32xf32, #tpu.memory_space<vmem>>) attributes {dimension_semantics = [#tpu.dimension_semantics<parallel>, #tpu.dimension_semantics<arbitrary>], iteration_bounds = array<i64: 1, 1>, scalar_prefetch = 0 : i64, scratch_operands = 1 : i64, tpu.core_type = #tpu.core_type<tc>, window_params = [{transform_indices = @transform_0, window_bounds = array<i64: 8, 32>}, {transform_indices = @transform_1, window_bounds = array<i64: 8, 32>}, {transform_indices = @transform_2, window_bounds = array<i64: 8, 128>}]} {
    %c0_i32 = arith.constant 0 : i32
    %0 = arith.cmpi eq, %arg1, %c0_i32 : i32
    %1 = arith.extui %0 : i1 to i32
    %c0_i32_0 = arith.constant 0 : i32
    %2 = arith.cmpi ne, %1, %c0_i32_0 : i32
    scf.if %2 {
      %cst_19 = arith.constant 0.000000e+00 : f32
      %58 = vector.broadcast %cst_19 : f32 to vector<8x32xf32>
      %c0_20 = arith.constant 0 : index
      %c0_21 = arith.constant 0 : index
      %59 = vector.load %arg5[%c0_20, %c0_21] : memref<8x32xf32, #tpu.memory_space<vmem>>, vector<8x32xf32>
      tpu.vector_store %arg5[%c0_20, %c0_21], %58 {strides = array<i32>} : memref<8x32xf32, #tpu.memory_space<vmem>>, vector<8x32xf32>,
    } else {
    }
    %c0 = arith.constant 0 : index
    %c0_1 = arith.constant 0 : index
    %3 = vector.load %arg2[%c0, %c0_1] : memref<8x32xf32, #tpu.memory_space<vmem>>, vector<8x32xf32>
    %c0_2 = arith.constant 0 : index
    %c0_3 = arith.constant 0 : index
    %4 = vector.load %arg3[%c0_2, %c0_3] : memref<8x32xf32, #tpu.memory_space<vmem>>, vector<8x32xf32>
    %cst = arith.constant dense<0xFF800000> : vector<8xf32>
    %5 = vector.multi_reduction <maximumf>, %3, %cst [1] : vector<8x32xf32> to vector<8xf32>
    %6 = vector.shape_cast %5 : vector<8xf32> to vector<8x1xf32>
    %7 = vector.broadcast %6 : vector<8x1xf32> to vector<8x32xf32>
    %8 = arith.subf %3, %7 : vector<8x32xf32>
    %9 = math.exp %8 : vector<8x32xf32>
    %cst_4 = arith.constant dense<0.000000e+00> : vector<8xf32>
    %10 = vector.multi_reduction <add>, %9, %cst_4 [1] : vector<8x32xf32> to vector<8xf32>
    %11 = vector.shape_cast %10 : vector<8xf32> to vector<8x1xf32>
    %12 = math.log %11 : vector<8x1xf32>
    %13 = vector.broadcast %12 : vector<8x1xf32> to vector<8x32xf32>
    %14 = arith.subf %8, %13 : vector<8x32xf32>
    %cst_5 = arith.constant 1.000000e+00 : f32
    %15 = vector.broadcast %cst_5 : f32 to vector<8x1xf32>
    %16 = arith.divf %15, %11 : vector<8x1xf32>
    %17 = vector.broadcast %16 : vector<8x1xf32> to vector<8x32xf32>
    %18 = arith.mulf %9, %17 : vector<8x32xf32>
    %cst_6 = arith.constant dense<0xFF800000> : vector<8xf32>
    %19 = vector.multi_reduction <maximumf>, %4, %cst_6 [1] : vector<8x32xf32> to vector<8xf32>
    %20 = vector.shape_cast %19 : vector<8xf32> to vector<8x1xf32>
    %21 = vector.broadcast %20 : vector<8x1xf32> to vector<8x32xf32>
    %22 = arith.subf %4, %21 : vector<8x32xf32>
    %23 = math.exp %22 : vector<8x32xf32>
    %cst_7 = arith.constant dense<0.000000e+00> : vector<8xf32>
    %24 = vector.multi_reduction <add>, %23, %cst_7 [1] : vector<8x32xf32> to vector<8xf32>
    %25 = vector.shape_cast %24 : vector<8xf32> to vector<8x1xf32>
    %26 = math.log %25 : vector<8x1xf32>
    %27 = vector.broadcast %26 : vector<8x1xf32> to vector<8x32xf32>
    %28 = arith.subf %22, %27 : vector<8x32xf32>
    %cst_8 = arith.constant 1.000000e+00 : f32
    %29 = vector.broadcast %cst_8 : f32 to vector<8x1xf32>
    %30 = arith.divf %29, %25 : vector<8x1xf32>
    %31 = vector.broadcast %30 : vector<8x1xf32> to vector<8x32xf32>
    %32 = arith.mulf %23, %31 : vector<8x32xf32>
    %33 = arith.addf %18, %32 : vector<8x32xf32>
    %cst_9 = arith.constant 5.000000e-01 : f32
    %34 = vector.broadcast %cst_9 : f32 to vector<8x32xf32>
    %35 = arith.mulf %34, %33 : vector<8x32xf32>
    %cst_10 = arith.constant 1.17549435E-38 : f32
    %36 = vector.broadcast %cst_10 : f32 to vector<8x32xf32>
    %37 = arith.maximumf %35, %36 : vector<8x32xf32>
    %38 = math.log %37 : vector<8x32xf32>
    %39 = arith.subf %14, %38 : vector<8x32xf32>
    %40 = arith.mulf %18, %39 : vector<8x32xf32>
    %41 = arith.subf %28, %38 : vector<8x32xf32>
    %42 = arith.mulf %32, %41 : vector<8x32xf32>
    %43 = arith.addf %40, %42 : vector<8x32xf32>
    %c1_i32 = arith.constant 1 : i32
    %44 = arith.muli %arg0, %c1_i32 : i32
    %45 = arith.addi %44, %arg1 : i32
    %c8_i32 = arith.constant 8 : i32
    %46 = arith.muli %45, %c8_i32 : i32
    %c8_i32_11 = arith.constant 8 : i32
    %47 = arith.addi %46, %c8_i32_11 : i32
    %c8_i32_12 = arith.constant 8 : i32
    %48 = arith.cmpi sgt, %47, %c8_i32_12 : i32
    %c8_i32_13 = arith.constant 8 : i32
    %49 = arith.addi %46, %c8_i32_13 : i32
    %c8_i32_14 = arith.constant 8 : i32
    %50 = arith.cmpi sle, %49, %c8_i32_14 : i32
    %51 = arith.extui %50 : i1 to i32
    %c0_i32_15 = arith.constant 0 : i32
    %52 = arith.cmpi ne, %51, %c0_i32_15 : i32
    scf.if %52 {
      %c0_19 = arith.constant 0 : index
      %c0_20 = arith.constant 0 : index
      %58 = vector.load %arg5[%c0_19, %c0_20] : memref<8x32xf32, #tpu.memory_space<vmem>>, vector<8x32xf32>
      %59 = vector.shape_cast %43 : vector<8x32xf32> to vector<1x8x32xf32>
      %cst_21 = arith.constant dense<0.000000e+00> : vector<8x32xf32>
      %60 = vector.multi_reduction <add>, %59, %cst_21 [0] : vector<1x8x32xf32> to vector<8x32xf32>
      %61 = arith.addf %58, %60 : vector<8x32xf32>
      %c0_22 = arith.constant 0 : index
      %c0_23 = arith.constant 0 : index
      %62 = vector.load %arg5[%c0_22, %c0_23] : memref<8x32xf32, #tpu.memory_space<vmem>>, vector<8x32xf32>
      tpu.vector_store %arg5[%c0_22, %c0_23], %61 {strides = array<i32>} : memref<8x32xf32, #tpu.memory_space<vmem>>, vector<8x32xf32>,
    } else {
    }
    %53 = arith.extui %48 : i1 to i32
    %c0_i32_16 = arith.constant 0 : i32
    %54 = arith.cmpi ne, %53, %c0_i32_16 : i32
    scf.if %54 {
      %58 = tpu.iota {dimensions = array<i32: 0>} : vector<8x1xi32>
      %59 = vector.broadcast %46 : i32 to vector<8x1xi32>
      %60 = arith.addi %59, %58 : vector<8x1xi32>
      %c0_19 = arith.constant 0 : index
      %c0_20 = arith.constant 0 : index
      %61 = vector.load %arg5[%c0_19, %c0_20] : memref<8x32xf32, #tpu.memory_space<vmem>>, vector<8x32xf32>
      %c8_i32_21 = arith.constant 8 : i32
      %62 = vector.broadcast %c8_i32_21 : i32 to vector<8x1xi32>
      %63 = arith.cmpi slt, %60, %62 : vector<8x1xi32>
      %cst_22 = arith.constant 0.000000e+00 : f32
      %64 = vector.shape_cast %63 : vector<8x1xi1> to vector<8x1xi1>
      %65 = vector.broadcast %64 : vector<8x1xi1> to vector<8x32xi1>
      %66 = vector.broadcast %cst_22 : f32 to vector<8x32xf32>
      %67 = arith.select %65, %43, %66 : vector<8x32xi1>, vector<8x32xf32>
      %68 = vector.shape_cast %67 : vector<8x32xf32> to vector<1x8x32xf32>
      %cst_23 = arith.constant dense<0.000000e+00> : vector<8x32xf32>
      %69 = vector.multi_reduction <add>, %68, %cst_23 [0] : vector<1x8x32xf32> to vector<8x32xf32>
      %70 = arith.addf %61, %69 : vector<8x32xf32>
      %c0_24 = arith.constant 0 : index
      %c0_25 = arith.constant 0 : index
      %71 = vector.load %arg5[%c0_24, %c0_25] : memref<8x32xf32, #tpu.memory_space<vmem>>, vector<8x32xf32>
      tpu.vector_store %arg5[%c0_24, %c0_25], %70 {strides = array<i32>} : memref<8x32xf32, #tpu.memory_space<vmem>>, vector<8x32xf32>,
    } else {
    }
    %c0_i32_17 = arith.constant 0 : i32
    %55 = arith.cmpi eq, %arg1, %c0_i32_17 : i32
    %56 = arith.extui %55 : i1 to i32
    %c0_i32_18 = arith.constant 0 : i32
    %57 = arith.cmpi ne, %56, %c0_i32_18 : i32
    scf.if %57 {
      %c0_19 = arith.constant 0 : index
      %c0_20 = arith.constant 0 : index
      %58 = vector.load %arg5[%c0_19, %c0_20] : memref<8x32xf32, #tpu.memory_space<vmem>>, vector<8x32xf32>
      %59 = vector.shape_cast %58 : vector<8x32xf32> to vector<1x8x32xf32>
      %cst_21 = arith.constant dense<0.000000e+00> : vector<1xf32>
      %60 = vector.multi_reduction <add>, %59, %cst_21 [1, 2] : vector<1x8x32xf32> to vector<1xf32>
      %61 = vector.shape_cast %60 : vector<1xf32> to vector<1x1x1xf32>
      %62 = vector.extract %61[0, 0, 0] : f32 from vector<1x1x1xf32>
      %63 = vector.broadcast %62 : f32 to vector<8x128xf32>
      %c0_22 = arith.constant 0 : index
      %c0_23 = arith.constant 0 : index
      %64 = vector.load %arg4[%c0_22, %c0_23] : memref<8x128xf32, #tpu.memory_space<vmem>>, vector<8x128xf32>
      tpu.vector_store %arg4[%c0_22, %c0_23], %63 {strides = array<i32>} : memref<8x128xf32, #tpu.memory_space<vmem>>, vector<8x128xf32>,
    } else {
    }
    return
  }
  func.func @transform_0(%arg0: i32, %arg1: i32) -> (i32, i32) {
    %c1_i32 = arith.constant 1 : i32
    %0 = arith.muli %arg0, %c1_i32 : i32
    %1 = arith.addi %0, %arg1 : i32
    %c0_i32 = arith.constant 0 : i32
    %2 = arith.minsi %1, %c0_i32 : i32
    %c0_i32_0 = arith.constant 0 : i32
    %c0_i32_1 = arith.constant 0 : i32
    return %2, %c0_i32_0 : i32, i32
  }
  func.func @transform_1(%arg0: i32, %arg1: i32) -> (i32, i32) {
    %c1_i32 = arith.constant 1 : i32
    %0 = arith.muli %arg0, %c1_i32 : i32
    %1 = arith.addi %0, %arg1 : i32
    %c0_i32 = arith.constant 0 : i32
    %2 = arith.minsi %1, %c0_i32 : i32
    %c0_i32_0 = arith.constant 0 : i32
    %c0_i32_1 = arith.constant 0 : i32
    return %2, %c0_i32_0 : i32, i32
  }
  func.func @transform_2(%arg0: i32, %arg1: i32) -> (i32, i32) {
    %c0_i32 = arith.constant 0 : i32
    %c0_i32_0 = arith.constant 0 : i32
    return %arg0, %c0_i32 : i32, i32
  }
}

</mosaic_0001>

<llo_original>
// kernel: tpu_custom_call.1
$region0: #{tpu_custom_call.1}
  #allocation0 [shape = 'u32[]', space=smem, size = 0x4, offset = 0x4, fixed_abs, tag = 'smem constant byte address 0x4 - core index']
  #allocation1 [shape = 'u32[144,128]{1,0:T(1,128)}', space=vmem, size = 0x12000, scoped, tag = 'internal scratch']
  #allocation2 [shape = 'f32[8,32]{1,0:T(8,128)}', space=vmem, size = 0x1000, scoped, tag = 'scratch operand']
  %s0 = inlined_call_operand.hbm [shape: f32[8,32], index: 0, kind: input, shape index: {}]
  %s1 = inlined_call_operand.hbm [shape: f32[8,32], index: 1, kind: input, shape index: {}]
  %s2 = inlined_call_operand.hbm [shape: f32[8,128], index: 2, kind: output, shape index: {}]
  %s3 = sld [smem:[#allocation0]]
  $region42: #{tpu_custom_call.1} parent=0
    _
  %s5 = ssub.s32 1, %s3
  %s6 = scalar_select 0, %s5, %s3
  $region1: #{tpu_custom_call.1} parent=0
    #allocation3 [shape = 'u8[4096]{0}', space=vmem, size = 0x1000, scoped, tag = 'input window, operand 0, single buffered']
    #allocation4 [shape = 's32[1]{0}', space=sflag, size = 0x4, scoped, tag = 'scoped memory for tpu_custom_call.1']
    #allocation5 [shape = 's32[1]{0}', space=sflag, size = 0x4, scoped, tag = 'scoped memory for tpu_custom_call.1']
    #allocation6 [shape = 'u8[4096]{0}', space=vmem, size = 0x1000, scoped, tag = 'input window, operand 1, single buffered']
    #allocation7 [shape = 's32[1]{0}', space=sflag, size = 0x4, scoped, tag = 'scoped memory for tpu_custom_call.1']
    #allocation8 [shape = 'u8[4096]{0}', space=vmem, size = 0x1000, scoped, tag = 'output window, operand 0, single buffered']
    %7 = vsyncpa [#allocation4], 0
    %8 = vsyncpa [#allocation7], 0
    %9 = vsyncpa [#allocation5], 0
    // Predicated region
    $region2: #{tpu_custom_call.1} parent=1 // pred_check
      _
    $region3: #{tpu_custom_call.1} parent=1 // pred_check_branch
      %11 = sbr.rel (0) target = $region5
    $region4: #{tpu_custom_call.1} parent=1 // pred_region
      %s12 = sadd.s32 0, 0
      %p13 = scmp.lt.s32.totalorder %s12, 0
      %s14 = scalar_select %p13, %s12, 0
      %s16 = ssub.s32 128, 128
      %17 = vsyncadd [#allocation4], %s16
      %s18 = smul.addr %s14, 128
      %s19 = scalar_lea.hbm %s0, %s18
      %s21 = sshll.u32 [#allocation3], 4
      %s22 = int_to_ptr.vmem [resolvable:$true] %s21
      %24 = dma.hbm_to_vmem [thread:$0]  %s19, 128, %s22, [#allocation4]
    $region5: #{tpu_custom_call.1} parent=1 // pred_fallthru
      _
    // Predicated region
    $region6: #{tpu_custom_call.1} parent=1 // pred_check
      _
    $region7: #{tpu_custom_call.1} parent=1 // pred_check_branch
      %26 = sbr.rel (0) target = $region9
    $region8: #{tpu_custom_call.1} parent=1 // pred_region
      %s27 = sadd.s32 0, 0
      %p28 = scmp.lt.s32.totalorder %s27, 0
      %s29 = scalar_select %p28, %s27, 0
      %s31 = ssub.s32 128, 128
      %32 = vsyncadd [#allocation7], %s31
      %s33 = smul.addr %s29, 128
      %s34 = scalar_lea.hbm %s1, %s33
      %s36 = sshll.u32 [#allocation6], 4
      %s37 = int_to_ptr.vmem [resolvable:$true] %s36
      %39 = dma.hbm_to_vmem [thread:$0]  %s34, 128, %s37, [#allocation7]
    $region9: #{tpu_custom_call.1} parent=1 // pred_fallthru
      _
    // Predicated region
    $region10: #{tpu_custom_call.1} parent=1 // pred_check
      _
    $region11: #{tpu_custom_call.1} parent=1 // pred_check_branch
      %41 = sbr.rel (0) target = $region13
    $region12: #{tpu_custom_call.1} parent=1 // pred_region
      %42 = dma.done [#allocation4], 128
    $region13: #{tpu_custom_call.1} parent=1 // pred_fallthru
      _
    // Predicated region
    $region14: #{tpu_custom_call.1} parent=1 // pred_check
      _
    $region15: #{tpu_custom_call.1} parent=1 // pred_check_branch
      %44 = sbr.rel (0) target = $region17
    $region16: #{tpu_custom_call.1} parent=1 // pred_region
      %45 = dma.done [#allocation7], 128
    $region17: #{tpu_custom_call.1} parent=1 // pred_fallthru
      _
    %s46 = sadd.s32 0, 0
    %p47 = scmp.lt.s32.totalorder %s46, 0
    %s48 = scalar_select %p47, %s46, 0
    %s49 = sadd.s32 0, 0
    %p50 = scmp.lt.s32.totalorder %s49, 0
    %s51 = scalar_select %p50, %s49, 0
    %p52 = scmp.eq.s32.totalorder 0, 0
    // Predicated region
    $region18: #{tpu_custom_call.1} parent=1 // pred_check
      %p53 = pneg %p52
    $region19: #{tpu_custom_call.1} parent=1 // pred_check_branch
      %55 = sbr.rel (%p53) target = $region21
    $region20: #{tpu_custom_call.1} parent=1 // pred_region
      %vm56 = vcmask 261120
      %57 = vst.msk [vmem:[#allocation2] sm:$0xff] %vm56, 0.0
    $region21: #{tpu_custom_call.1} parent=1 // pred_fallthru
      _
    %v58 = vld [vmem:[#allocation3] sm:$0xff]
    %v59 = vld [vmem:[#allocation6] sm:$0xff]
    %vm60 = vcmask 261120
    %v61 = vsel %vm60, %v58, -inf
    %62 = vmax.xlane.f32.xlu0 %v61
    %v63 = vpop.xlane.xlu0 %62
    %v64 = vsub.f32 %v58, %v63
    %v65 = vmul.f32 %v64, 1.442695
    %v66 = vpow.pop %v65
    %v67 = vsel %vm60, %v66, 0.0
    %68 = vadd.xlane.f32.xlu0 %v67
    %v69 = vpop.xlane.xlu0 %68
    %v70 = vlog2.pop %v69
    %v71 = vmul.f32 %v70, 0.6931472
    %v72 = vsub.f32 %v64, %v71
    %v73 = vrcp.pop %v69
    %v74 = vmul.f32 1.0, %v73
    %v75 = vmul.f32 %v66, %v74
    %v76 = vsel %vm60, %v59, -inf
    %77 = vmax.xlane.f32.xlu0 %v76
    %v78 = vpop.xlane.xlu0 %77
    %v79 = vsub.f32 %v59, %v78
    %v80 = vmul.f32 %v79, 1.442695
    %v81 = vpow.pop %v80
    %v82 = vsel %vm60, %v81, 0.0
    %83 = vadd.xlane.f32.xlu0 %v82
    %v84 = vpop.xlane.xlu0 %83
    %v85 = vlog2.pop %v84
    %v86 = vmul.f32 %v85, 0.6931472
    %v87 = vsub.f32 %v79, %v86
    %v88 = vrcp.pop %v84
    %v89 = vmul.f32 1.0, %v88
    %v90 = vmul.f32 %v81, %v89
    %v91 = vadd.f32 %v75, %v90
    %v92 = vmul.f32 %v91, 0.5
    %v93 = vmax.f32 %v92, 1.1754944e-38
    %v94 = vlog2.pop %v93
    %v95 = vmul.f32 %v94, 0.6931472
    %v96 = vsub.f32 %v72, %v95
    %v97 = vmul.f32 %v75, %v96
    %v98 = vsub.f32 %v87, %v95
    %v99 = vmul.f32 %v90, %v98
    %v100 = vadd.f32 %v97, %v99
    %s101 = sadd.s32 0, 0
    %s102 = smul.u32 %s101, 8
    %s103 = sadd.s32 %s102, 8
    %p104 = scmp.gt.s32.totalorder %s103, 8
    %p105 = scmp.le.s32.totalorder %s103, 8
    // Predicated region
    $region22: #{tpu_custom_call.1} parent=1 // pred_check
      %p106 = pneg %p105
    $region23: #{tpu_custom_call.1} parent=1 // pred_check_branch
      %108 = sbr.rel (%p106) target = $region25
    $region24: #{tpu_custom_call.1} parent=1 // pred_region
      %v109 = vld [vmem:[#allocation2] sm:$0xff]
      %v110 = vadd.f32 %v100, 0.0
      %v111 = vadd.f32 %v109, %v110
      %112 = vst.msk [vmem:[#allocation2] sm:$0xff] %vm60, %v111
    $region25: #{tpu_custom_call.1} parent=1 // pred_fallthru
      _
    // Predicated region
    $region26: #{tpu_custom_call.1} parent=1 // pred_check
      %p113 = pneg %p104
    $region27: #{tpu_custom_call.1} parent=1 // pred_check_branch
      %115 = sbr.rel (%p113) target = $region29
    $region28: #{tpu_custom_call.1} parent=1 // pred_region
      %v116 = vlaneseq
      %v117 = vshrl.u32 %v116, 7
      %v118 = vstv %s102
      %v119 = vadd.s32 %v118, %v117
      %v120 = vld [vmem:[#allocation2] sm:$0xff]
      %vm121 = vcmp.lt.s32.totalorder %v119, 8
      %v122 = vsel %vm121, 1, 0
      %vm123 = vcmp.eq.s32.totalorder %v122, 1
      %v124 = vsel %vm123, %v100, 0.0
      %v125 = vadd.f32 %v124, 0.0
      %v126 = vadd.f32 %v120, %v125
      %127 = vst.msk [vmem:[#allocation2] sm:$0xff] %vm60, %v126
    $region29: #{tpu_custom_call.1} parent=1 // pred_fallthru
      _
    // Predicated region
    $region30: #{tpu_custom_call.1} parent=1 // pred_check
      %p128 = pneg %p52
    $region31: #{tpu_custom_call.1} parent=1 // pred_check_branch
      %130 = sbr.rel (%p128) target = $region33
    $region32: #{tpu_custom_call.1} parent=1 // pred_region
      %v131 = vld [vmem:[#allocation2] sm:$0xff]
      %v132 = vsel %vm60, %v131, 0.0
      %133 = vadd.xlane.f32.xlu0 %v132
      %v134 = vpop.xlane.xlu0 %133
      %v135 = vrot.slane %v134, 4
      %v136 = vadd.f32 %v134, %v135
      %v137 = vrot.slane %v136, 2
      %v138 = vadd.f32 %v136, %v137
      %v139 = vrot.slane %v138, 1
      %v140 = vadd.f32 %v138, %v139
      %s141 = vtos %v140
      %v142 = vstv %s141
      %143 = vst [vmem:[#allocation8] sm:$0xff] %v142
    $region33: #{tpu_custom_call.1} parent=1 // pred_fallthru
      _
    // Predicated region
    $region34: #{tpu_custom_call.1} parent=1 // pred_check
      _
    $region35: #{tpu_custom_call.1} parent=1 // pred_check_branch
      %145 = sbr.rel (0) target = $region37
    $region36: #{tpu_custom_call.1} parent=1 // pred_region
      %s147 = ssub.s32 128, 128
      %148 = vsyncadd [#allocation5], %s147
      %s150 = sshll.u32 [#allocation8], 4
      %s151 = int_to_ptr.vmem [resolvable:$true] %s150
      %153 = dma.vmem_to_hbm [thread:$0]  %s151, 128, %s2, [#allocation5]
    $region37: #{tpu_custom_call.1} parent=1 // pred_fallthru
      _
    // Predicated region
    $region38: #{tpu_custom_call.1} parent=1 // pred_check
      _
    $region39: #{tpu_custom_call.1} parent=1 // pred_check_branch
      %155 = sbr.rel (0) target = $region41
    $region40: #{tpu_custom_call.1} parent=1 // pred_region
      %156 = dma.done [#allocation5], 128
    $region41: #{tpu_custom_call.1} parent=1 // pred_fallthru
      _
    %157 = vsyncpa [#allocation4], 1
    %158 = vsyncpa [#allocation7], 1
    %159 = vsyncpa [#allocation5], 1

</llo_original>
